<compile_context>
chip_gen: v7x
topology: tpu7x:2x2x1
jax: 0.10.0
libtpu: 0.0.40
codegen_flags: <defaults>
</compile_context>

<pallas_src>
import functools

import jax
import jax.numpy as jnp
from jax.experimental import pallas as pl
from jax.experimental.pallas import tpu as pltpu


def _partial_avg_kernel(x_ref, out_ref, acc_ref, *, inv_hw):
    # x_ref:   (row_tile, hw_tile) tile of the (B*nA, HW_pad) pooled rows
    # out_ref: (1, row_tile, 1) f32 partial-mean block (resident over the HW axis)
    # acc_ref: (row_tile, 1) f32 scratch accumulator
    t = pl.program_id(2)

    @pl.when(t == 0)
    def _():
        acc_ref[...] = jnp.zeros_like(acc_ref)

    # Partial sum over this spatial tile (f32 accumulation, safe for bf16 in).
    acc_ref[...] += jnp.sum(x_ref[...].astype(jnp.float32), axis=-1, keepdims=True)

    @pl.when(t == pl.num_programs(2) - 1)
    def _():
        # Multiply by the compile-time constant 1/HW (zero padding is exact).
        out_ref[...] = (acc_ref[...] * inv_hw)[None].astype(out_ref.dtype)


def _round_up(x, m):
    return (x + m - 1) // m * m


def _sublane_multiple(dtype):
    # Minimum sublane packing: 8 for 32-bit, 16 for 16-bit, 32 for 8-bit types.
    return max(8, 32 // jnp.dtype(dtype).itemsize)


def _pick_tiles(total_rows, hw, dtype, vmem_budget_bytes):
    """Padding-aware tile selection for the (total_rows, HW) reduction.

    Returns (row_tile, hw_tile, n_hw_tiles, hw_pad).
    """
    itemsize = jnp.dtype(dtype).itemsize
    sub = _sublane_multiple(dtype)

    # Row tile: a multiple of 8 dividing total_rows (capped), else the full dim
    # (a block dim equal to the full array dim is always layout-legal).
    if total_rows % 8 == 0:
        row_tile = min(total_rows, 256)
        while total_rows % row_tile != 0:
            row_tile -= 8
    else:
        row_tile = total_rows
    rows_pad = _round_up(row_tile, sub)

    # Single whole-HW block if the double-buffered, sublane/lane-padded block
    # fits the budget (block last dim == full dim needs no 128-divisibility).
    full_bytes = 2 * rows_pad * _round_up(hw, 128) * itemsize
    if full_bytes <= vmem_budget_bytes:
        return row_tile, hw, 1, hw

    # Otherwise tile HW: largest 128-multiple under budget; pad HW up to a
    # multiple of the tile so every block is full (zeros are exact for a sum).
    max_lanes = (vmem_budget_bytes // (2 * rows_pad * itemsize)) // 128 * 128
    hw_tile = max(128, min(max_lanes, _round_up(hw, 128)))
    hw_pad = _round_up(hw, hw_tile)
    return row_tile, hw_tile, hw_pad // hw_tile, hw_pad


def partial_avg_pool(features, num_average, *, vmem_budget_bytes=8 * 1024 * 1024):
    """features: [B, C, H, W] -> [B, (C - num_average)*H*W + num_average]."""
    B, C, H, W = features.shape
    if not (1 <= num_average <= C):
        raise ValueError("num_average must be in [1, C]")
    HW = H * W
    c_keep = C - num_average
    total_rows = B * num_average

    row_tile, hw_tile, n_hw_tiles, hw_pad = _pick_tiles(
        total_rows, HW, features.dtype, vmem_budget_bytes)
    n_row_blocks = total_rows // row_tile

    # v7x megacore: with a single row block, split the HW reduction over a
    # leading parallel axis so both TensorCores get work (no-op on 1-TC chips).
    n_split = 1
    if n_row_blocks == 1 and n_hw_tiles >= 2:
        if n_hw_tiles % 2:
            n_hw_tiles += 1
            hw_pad += hw_tile
        n_split = 2
    ht_per_split = n_hw_tiles // n_split

    # Only the pooled channels ever reach the kernel.  allow_input_fusion lets
    # XLA fuse this slice/reshape (and pad) into the pallas_call operand instead
    # of materializing a separate HBM buffer.
    tail = features[:, c_keep:, :, :].reshape(total_rows, HW)
    if hw_pad != HW:
        tail = jnp.pad(tail, ((0, 0), (0, hw_pad - HW)))

    def in_index(s, r, t):
        return (r, s * ht_per_split + t)

    partial = pl.pallas_call(
        functools.partial(_partial_avg_kernel, inv_hw=1.0 / HW),
        out_shape=jax.ShapeDtypeStruct((n_split, total_rows, 1), jnp.float32),
        grid_spec=pltpu.PrefetchScalarGridSpec(
            num_scalar_prefetch=0,
            grid=(n_split, n_row_blocks, ht_per_split),
            in_specs=[pl.BlockSpec((row_tile, hw_tile), in_index)],
            out_specs=pl.BlockSpec((1, row_tile, 1), lambda s, r, t: (s, r, 0)),
            scratch_shapes=[pltpu.VMEM((row_tile, 1), jnp.float32)],
        ),
        compiler_params=pltpu.CompilerParams(
            dimension_semantics=("parallel", "parallel", "arbitrary"),
            allow_input_fusion=[True],
        ),
    )(tail)

    avg = (jnp.sum(partial, axis=0)
           .reshape(B, num_average)
           .astype(features.dtype))

    if c_keep == 0:
        return avg

    # Passthrough channels: flattened and concatenated exactly once by XLA
    # (pure data movement; no reason to route it through VMEM).
    keep_flat = features[:, :c_keep, :, :].reshape(B, c_keep * HW)
    return jnp.concatenate([keep_flat, avg], axis=1)


def _reference(features, num_average):
    B, C = features.shape[0], features.shape[1]
    keep = features[:, : C - num_average, :, :].reshape(B, -1)
    avg = jnp.mean(
        features[:, C - num_average:, :, :].astype(jnp.float32), axis=(2, 3)
    ).astype(features.dtype)
    return jnp.concatenate([keep, avg], axis=1)


if __name__ == "__main__":
    key = jax.random.PRNGKey(0)

    # Case 1: module-sized shapes, default (single-block) path.
    B, C, H, W = 2, 4, 16, 16
    num_average = 2
    x = jax.random.normal(key, (B, C, H, W), dtype=jnp.float32)
    out = jax.block_until_ready(partial_avg_pool(x, num_average))
    ref = _reference(x, num_average)
    assert out.shape == (B, (C - num_average) * H * W + num_average), out.shape
    assert jnp.allclose(out, ref, atol=1e-5, rtol=1e-5), "case 1 mismatch"

    # Case 2: exercise non-128-divisible HW (14x14=196), zero-padded spatial
    # tiling and the megacore split path by shrinking the VMEM budget.
    B2, C2, H2, W2 = 1, 3, 14, 14
    x2 = jax.random.normal(jax.random.PRNGKey(0), (B2, C2, H2, W2), dtype=jnp.float32)
    out2 = jax.block_until_ready(partial_avg_pool(x2, 1, vmem_budget_bytes=2048))
    ref2 = _reference(x2, 1)
    assert out2.shape == ref2.shape, out2.shape
    assert jnp.allclose(out2, ref2, atol=1e-5, rtol=1e-5), "case 2 mismatch"

    print("KERNEL_OK")
</pallas_src>

<mosaic_0001>
module attributes {stable_mosaic.version = 11 : i64} {
  func.func @_partial_avg_kernel(%arg0: i32, %arg1: i32, %arg2: i32, %arg3: memref<4x256xf32, #tpu.memory_space<vmem>>, %arg4: memref<1x4x1xf32, #tpu.memory_space<vmem>>, %arg5: memref<4x1xf32, #tpu.memory_space<vmem>>) attributes {dimension_semantics = [#tpu.dimension_semantics<parallel>, #tpu.dimension_semantics<parallel>, #tpu.dimension_semantics<arbitrary>], iteration_bounds = array<i64: 1, 1, 1>, scalar_prefetch = 0 : i64, scratch_operands = 1 : i64, tpu.core_type = #tpu.core_type<tc>, window_params = [{transform_indices = @transform_0, window_bounds = array<i64: 4, 256>}, {transform_indices = @transform_1, window_bounds = array<i64: 1, 4, 1>}]} {
    %c0_i32 = arith.constant 0 : i32
    %0 = arith.cmpi eq, %arg2, %c0_i32 : i32
    %1 = arith.extui %0 : i1 to i32
    %c0_i32_0 = arith.constant 0 : i32
    %2 = arith.cmpi ne, %1, %c0_i32_0 : i32
    scf.if %2 {
      %cst_8 = arith.constant 0.000000e+00 : f32
      %12 = vector.broadcast %cst_8 : f32 to vector<4x1xf32>
      %c0_9 = arith.constant 0 : index
      %c0_10 = arith.constant 0 : index
      %13 = vector.load %arg5[%c0_9, %c0_10] : memref<4x1xf32, #tpu.memory_space<vmem>>, vector<4x1xf32>
      tpu.vector_store %arg5[%c0_9, %c0_10], %12 {strides = array<i32>} : memref<4x1xf32, #tpu.memory_space<vmem>>, vector<4x1xf32>,
    } else {
    }
    %c0 = arith.constant 0 : index
    %c0_1 = arith.constant 0 : index
    %3 = vector.load %arg5[%c0, %c0_1] : memref<4x1xf32, #tpu.memory_space<vmem>>, vector<4x1xf32>
    %c0_2 = arith.constant 0 : index
    %c0_3 = arith.constant 0 : index
    %4 = vector.load %arg3[%c0_2, %c0_3] : memref<4x256xf32, #tpu.memory_space<vmem>>, vector<4x256xf32>
    %cst = arith.constant dense<0.000000e+00> : vector<4xf32>
    %5 = vector.multi_reduction <add>, %4, %cst [1] : vector<4x256xf32> to vector<4xf32>
    %6 = vector.shape_cast %5 : vector<4xf32> to vector<4x1xf32>
    %7 = arith.addf %3, %6 : vector<4x1xf32>
    %c0_4 = arith.constant 0 : index
    %c0_5 = arith.constant 0 : index
    %8 = vector.load %arg5[%c0_4, %c0_5] : memref<4x1xf32, #tpu.memory_space<vmem>>, vector<4x1xf32>
    tpu.vector_store %arg5[%c0_4, %c0_5], %7 {strides = array<i32>} : memref<4x1xf32, #tpu.memory_space<vmem>>, vector<4x1xf32>,
    %c0_i32_6 = arith.constant 0 : i32
    %9 = arith.cmpi eq, %arg2, %c0_i32_6 : i32
    %10 = arith.extui %9 : i1 to i32
    %c0_i32_7 = arith.constant 0 : i32
    %11 = arith.cmpi ne, %10, %c0_i32_7 : i32
    scf.if %11 {
      %c0_8 = arith.constant 0 : index
      %c0_9 = arith.constant 0 : index
      %12 = vector.load %arg5[%c0_8, %c0_9] : memref<4x1xf32, #tpu.memory_space<vmem>>, vector<4x1xf32>
      %cst_10 = arith.constant 3.906250e-03 : f32
      %13 = vector.broadcast %cst_10 : f32 to vector<4x1xf32>
      %14 = arith.mulf %12, %13 : vector<4x1xf32>
      %15 = vector.shape_cast %14 : vector<4x1xf32> to vector<1x4x1xf32>
      %c0_11 = arith.constant 0 : index
      %c0_12 = arith.constant 0 : index
      %c0_13 = arith.constant 0 : index
      %16 = vector.load %arg4[%c0_11, %c0_12, %c0_13] : memref<1x4x1xf32, #tpu.memory_space<vmem>>, vector<1x4x1xf32>
      tpu.vector_store %arg4[%c0_11, %c0_12, %c0_13], %15 {strides = array<i32>} : memref<1x4x1xf32, #tpu.memory_space<vmem>>, vector<1x4x1xf32>,
    } else {
    }
    return
  }
  func.func @transform_0(%arg0: i32, %arg1: i32, %arg2: i32) -> (i32, i32) {
    %c1_i32 = arith.constant 1 : i32
    %0 = arith.muli %arg0, %c1_i32 : i32
    %1 = arith.addi %0, %arg2 : i32
    %c0_i32 = arith.constant 0 : i32
    return %arg1, %1 : i32, i32
  }
  func.func @transform_1(%arg0: i32, %arg1: i32, %arg2: i32) -> (i32, i32, i32) {
    %c0_i32 = arith.constant 0 : i32
    %c0_i32_0 = arith.constant 0 : i32
    return %arg0, %arg1, %c0_i32 : i32, i32, i32
  }
}

</mosaic_0001>

<llo_original>
// kernel: tpu_custom_call.1
$region0: #{tpu_custom_call.1}
  #allocation0 [shape = 'u32[]', space=smem, size = 0x4, offset = 0x4, fixed_abs, tag = 'smem constant byte address 0x4 - core index']
  #allocation1 [shape = 'u32[144,128]{1,0:T(1,128)}', space=vmem, size = 0x12000, scoped, tag = 'internal scratch']
  #allocation2 [shape = 'f32[4,1]{1,0:T(4,128)}', space=vmem, size = 0x800, scoped, tag = 'scratch operand']
  %s0 = inlined_call_operand.hbm [shape: f32[4,256], index: 0, kind: input, shape index: {}]
  %s1 = inlined_call_operand.vmem [shape: f32[1,4,1], index: 1, kind: output, shape index: {}]
  %s2 = sld [smem:[#allocation0]]
  $region26: #{tpu_custom_call.1} parent=0
    _
  %s4 = ssub.s32 1, %s2
  %s5 = scalar_select 0, %s4, %s2
  $region1: #{tpu_custom_call.1} parent=0
    #allocation3 [shape = 'u8[4096]{0}', space=vmem, size = 0x1000, scoped, tag = 'input window, operand 0, single buffered']
    #allocation4 [shape = 's32[1]{0}', space=sflag, size = 0x4, scoped, tag = 'scoped memory for tpu_custom_call.1']
    %6 = vsyncpa [#allocation4], 0
    // Predicated region
    $region2: #{tpu_custom_call.1} parent=1 // pred_check
      _
    $region3: #{tpu_custom_call.1} parent=1 // pred_check_branch
      %8 = sbr.rel (0) target = $region5
    $region4: #{tpu_custom_call.1} parent=1 // pred_region
      %s9 = sadd.s32 0, 0
      %s10 = smul.u32 2, %s9
      %s12 = ssub.s32 128, 128
      %13 = vsyncadd [#allocation4], %s12
      %s14 = smul.addr %s10, 64
      %s15 = scalar_lea.hbm %s0, %s14
      %s17 = sshll.u32 [#allocation3], 4
      %s18 = int_to_ptr.vmem [resolvable:$true] %s17
      %20 = dma.hbm_to_vmem [thread:$0]  %s15, 128, %s18, [#allocation4]
    $region5: #{tpu_custom_call.1} parent=1 // pred_fallthru
      _
    // Predicated region
    $region6: #{tpu_custom_call.1} parent=1 // pred_check
      _
    $region7: #{tpu_custom_call.1} parent=1 // pred_check_branch
      %22 = sbr.rel (0) target = $region9
    $region8: #{tpu_custom_call.1} parent=1 // pred_region
      %23 = dma.done [#allocation4], 128
    $region9: #{tpu_custom_call.1} parent=1 // pred_fallthru
      _
    %s24 = sadd.s32 0, 0
    %s25 = smul.u32 2, %s24
    %p26 = scmp.eq.s32.totalorder 0, 0
    // Predicated region
    $region10: #{tpu_custom_call.1} parent=1 // pred_check
      %p27 = pneg %p26
    $region11: #{tpu_custom_call.1} parent=1 // pred_check_branch
      %29 = sbr.rel (%p27) target = $region13
    $region12: #{tpu_custom_call.1} parent=1 // pred_region
      %vm30 = vcmask 3072
      %31 = vst.msk [vmem:[#allocation2] sm:$0xf] %vm30, 0.0
    $region13: #{tpu_custom_call.1} parent=1 // pred_fallthru
      _
    %v32 = vld [vmem:[#allocation2] sm:$0xf]
    %v33 = vld [vmem:[#allocation3] sm:$0xff]
    %v35 = vcombine.high %v33, %v33
    %vm37 = vcmask 1043456
    %v38 = vsel %vm37, %v33, 0.0
    %v39 = vsel %vm37, %v35, 0.0
    %v40 = vadd.f32 %v38, %v39
    %41 = vadd.xlane.f32.xlu0 %v40
    %v42 = vpop.xlane.xlu0 %41
    %v43 = vadd.f32 %v32, %v42
    %vm44 = vcmask 3072
    %45 = vst.msk [vmem:[#allocation2] sm:$0xf] %vm44, %v43
    // Predicated region
    $region14: #{tpu_custom_call.1} parent=1 // pred_check
      %p46 = pneg %p26
    $region15: #{tpu_custom_call.1} parent=1 // pred_check_branch
      %48 = sbr.rel (%p46) target = $region17
    $region16: #{tpu_custom_call.1} parent=1 // pred_region
      %v49 = vld [vmem:[#allocation2] sm:$0xf]
      %v50 = vmul.f32 %v49, 0.00390625
      %51 = vst.msk [vmem:[%s1] sm:$0xf] %vm44, %v50
    $region17: #{tpu_custom_call.1} parent=1 // pred_fallthru
      _
    // Predicated region
    $region18: #{tpu_custom_call.1} parent=1 // pred_check
      _
    $region19: #{tpu_custom_call.1} parent=1 // pred_check_branch
      %53 = sbr.rel (0) target = $region21
    $region20: #{tpu_custom_call.1} parent=1 // pred_region
      _
    $region21: #{tpu_custom_call.1} parent=1 // pred_fallthru
      _
    // Predicated region
    $region22: #{tpu_custom_call.1} parent=1 // pred_check
      _
    $region23: #{tpu_custom_call.1} parent=1 // pred_check_branch
      %55 = sbr.rel (0) target = $region25
    $region24: #{tpu_custom_call.1} parent=1 // pred_region
      _
    $region25: #{tpu_custom_call.1} parent=1 // pred_fallthru
      _
    %56 = vsyncpa [#allocation4], 1

</llo_original>
